<compile_context>
chip_gen: v5e
topology: v5e:2x2
jax: 0.10.0
libtpu: 0.0.40
codegen_flags: <defaults>
</compile_context>

<pallas_src>
import functools

import jax
import jax.numpy as jnp
from jax.experimental import pallas as pl

EPS = 1e-5     # PyTorch BatchNorm1d default eps
F_PAD = 128    # lane-dense width for the class/output dimension


def _classifier_kernel(cluster_num, x_ref, w1_ref, w2_ref, p_ref, o1_ref, o2_ref):
    """Fused Linear->BN->ReLU->Linear->BN->ReLU->Softmax over the stacked (h, h_t) batch.

    x_ref : (2B, S)   rows [0,B) are the h samples, rows [B,2B) the h_t samples
    w1_ref: (S, H1)   Linear-1 weight, contraction/output compact (no zero padding)
    w2_ref: (H1, 128) Linear-2 weight, output lane-padded to 128
    p_ref : (8, 128)  packed per-channel params rows [b1,g1,be1,b2,g2,be2,0,0]
    o1/o2 : (B, 128)  softmax(net(h)), softmax(net(h_t)); wrapper slices [:, :cluster_num]
    """
    B = o1_ref.shape[0]
    h1 = w1_ref.shape[1]

    p = p_ref[...]
    b1, g1, be1 = p[0:1, :h1], p[1:2, :h1], p[2:3, :h1]
    b2, g2, be2 = p[3:4], p[4:5], p[5:6]

    # Row mask separating the two independent BatchNorm batches (h rows vs h_t rows).
    is_h = jax.lax.broadcasted_iota(jnp.int32, (2 * B, 1), 0) < B

    def bn_relu(t, gamma, beta):
        # Training-mode BatchNorm1d (biased batch variance, two-pass), stats per half.
        th, tt = t[:B], t[B:]
        mh = jnp.mean(th, axis=0, keepdims=True)
        mt = jnp.mean(tt, axis=0, keepdims=True)
        vh = jnp.mean((th - mh) * (th - mh), axis=0, keepdims=True)
        vt = jnp.mean((tt - mt) * (tt - mt), axis=0, keepdims=True)
        sh = jax.lax.rsqrt(vh + EPS) * gamma
        st = jax.lax.rsqrt(vt + EPS) * gamma
        scale = jnp.where(is_h, sh, st)                      # (2B, F) per-row-half select
        shift = jnp.where(is_h, beta - mh * sh, beta - mt * st)
        return jnp.maximum(t * scale + shift, 0.0)

    # ---- Linear 1: single (2B, S) x (S, H1) MXU op for both matrices ----
    y = jnp.dot(x_ref[...], w1_ref[...], preferred_element_type=jnp.float32) + b1
    a1 = bn_relu(y, g1, be1)

    # ---- Linear 2: (2B, H1) x (H1, 128) -> lane-dense class logits ----
    z = jnp.dot(a1, w2_ref[...], preferred_element_type=jnp.float32) + b2
    a2 = bn_relu(z, g2, be2)

    # ---- Masked softmax over the real cluster_num lanes, fused over both halves ----
    valid = jax.lax.broadcasted_iota(jnp.int32, (1, a2.shape[1]), 1) < cluster_num
    zmax = jnp.max(jnp.where(valid, a2, -jnp.inf), axis=1, keepdims=True)
    e = jnp.where(valid, jnp.exp(a2 - zmax), 0.0)
    sm = e / jnp.sum(e, axis=1, keepdims=True)               # exact normalization

    o1_ref[...] = sm[:B]                                      # full-vreg unmasked stores
    o2_ref[...] = sm[B:]


def make_params(key, start_size, cluster_num):
    """Deterministic parameter init mimicking PyTorch defaults (logical layout)."""
    h1 = start_size // 4
    k1, k2, k3, k4 = jax.random.split(key, 4)
    lim1 = 1.0 / float(start_size) ** 0.5
    lim2 = 1.0 / float(h1) ** 0.5
    return dict(
        w1=jax.random.uniform(k1, (start_size, h1), jnp.float32, -lim1, lim1),
        b1=jax.random.uniform(k2, (h1,), jnp.float32, -lim1, lim1),
        g1=jnp.ones((h1,), jnp.float32),
        be1=jnp.zeros((h1,), jnp.float32),
        w2=jax.random.uniform(k3, (h1, cluster_num), jnp.float32, -lim2, lim2),
        b2=jax.random.uniform(k4, (cluster_num,), jnp.float32, -lim2, lim2),
        g2=jnp.ones((cluster_num,), jnp.float32),
        be2=jnp.zeros((cluster_num,), jnp.float32),
    )


def pack_params(params):
    """One-time host-side packing: compact f32 weights + one packed param tile."""
    _, h1 = params["w1"].shape
    C = params["w2"].shape[1]
    w2p = jnp.zeros((h1, F_PAD), jnp.float32).at[:, :C].set(params["w2"])
    pvec = jnp.zeros((8, F_PAD), jnp.float32)
    pvec = pvec.at[0, :h1].set(params["b1"])
    pvec = pvec.at[1, :h1].set(params["g1"])
    pvec = pvec.at[2, :h1].set(params["be1"])
    pvec = pvec.at[3, :C].set(params["b2"])
    pvec = pvec.at[4, :C].set(params["g2"])
    pvec = pvec.at[5, :C].set(params["be2"])
    return dict(w1=params["w1"], w2p=w2p, pvec=pvec)


def classifier_forward(h, h_t, packed, cluster_num):
    """h, h_t: (num_layers*bidirectional, batch, hidden) float32."""
    L, B, H = h.shape
    S = L * H
    # permute(1,0,2).reshape(-1, S) done in the wrapper (4 KiB each) so the kernel
    # runs one lane-dense (2B, S) matmul instead of L accumulating K=H matmuls.
    x_h = jnp.transpose(h, (1, 0, 2)).reshape(B, S)
    x_t = jnp.transpose(h_t, (1, 0, 2)).reshape(B, S)
    x = jnp.concatenate([x_h, x_t], axis=0)                   # (2B, S)

    out_sds = jax.ShapeDtypeStruct((B, F_PAD), jnp.float32)
    o1, o2 = pl.pallas_call(
        functools.partial(_classifier_kernel, cluster_num),
        out_shape=(out_sds, out_sds),
    )(x, packed["w1"], packed["w2p"], packed["pvec"])
    return o1[:, :cluster_num], o2[:, :cluster_num]
    # TODO(synk): if called repeatedly, fold calls into one gridded pallas_call with
    # constant-index weight BlockSpecs so launch + weight DMA amortize across steps.


def reference_forward(h, h_t, params):
    """Pure-JAX reference of the PyTorch module (training-mode BN)."""
    hp = jax.lax.Precision.HIGHEST

    def net(x):
        y = jnp.dot(x, params["w1"], precision=hp) + params["b1"]
        m = y.mean(0)
        v = ((y - m) ** 2).mean(0)
        y = jnp.maximum((y - m) * jax.lax.rsqrt(v + EPS) * params["g1"] + params["be1"], 0.0)
        z = jnp.dot(y, params["w2"], precision=hp) + params["b2"]
        m2 = z.mean(0)
        v2 = ((z - m2) ** 2).mean(0)
        z = jnp.maximum((z - m2) * jax.lax.rsqrt(v2 + EPS) * params["g2"] + params["be2"], 0.0)
        return jax.nn.softmax(z, axis=1)

    L, B, H = h.shape
    x = jnp.transpose(h, (1, 0, 2)).reshape(B, L * H)
    xt = jnp.transpose(h_t, (1, 0, 2)).reshape(B, L * H)
    return net(x), net(xt)


if __name__ == "__main__":
    # Config: hidden_size=32, bidirectional=2, num_layers=2 -> start_size=128
    hidden_size = 32
    bidirectional = 2
    num_layers = 2
    cluster_num = 8
    batch = 8
    L = bidirectional * num_layers
    start_size = L * hidden_size

    key = jax.random.PRNGKey(0)
    k_h, k_ht, k_p = jax.random.split(key, 3)
    h = jax.random.normal(k_h, (L, batch, hidden_size), jnp.float32)
    h_t = jax.random.normal(k_ht, (L, batch, hidden_size), jnp.float32)
    params = make_params(k_p, start_size, cluster_num)
    packed = pack_params(params)

    fwd = jax.jit(classifier_forward, static_argnums=(3,))
    res_h, res_h_to = fwd(h, h_t, packed, cluster_num)
    jax.block_until_ready((res_h, res_h_to))

    # Correctness checks against a pure-JAX reference of the PyTorch forward.
    ref_h, ref_h_to = reference_forward(h, h_t, params)
    assert res_h.shape == (batch, cluster_num)
    assert res_h_to.shape == (batch, cluster_num)
    # Exact-division softmax: rows sum to 1 to f32 rounding.
    assert jnp.allclose(jnp.sum(res_h, axis=1), 1.0, atol=1e-3)
    assert jnp.allclose(jnp.sum(res_h_to, axis=1), 1.0, atol=1e-3)
    # Elementwise match (tolerance covers MXU-vs-XLA f32 matmul precision differences).
    assert jnp.allclose(res_h, ref_h, atol=1e-2, rtol=1e-2)
    assert jnp.allclose(res_h_to, ref_h_to, atol=1e-2, rtol=1e-2)
    print("KERNEL_OK")
</pallas_src>

<mosaic_0001>
module attributes {stable_mosaic.version = 11 : i64} {
  func.func @_classifier_kernel(%arg0: memref<16x128xf32, #tpu.memory_space<vmem>>, %arg1: memref<128x32xf32, #tpu.memory_space<vmem>>, %arg2: memref<32x128xf32, #tpu.memory_space<vmem>>, %arg3: memref<8x128xf32, #tpu.memory_space<vmem>>, %arg4: memref<8x128xf32, #tpu.memory_space<vmem>>, %arg5: memref<8x128xf32, #tpu.memory_space<vmem>>) attributes {dimension_semantics = [], scalar_prefetch = 0 : i64, scratch_operands = 0 : i64, tpu.core_type = #tpu.core_type<tc>} {
    %c0 = arith.constant 0 : index
    %c0_0 = arith.constant 0 : index
    %0 = vector.load %arg3[%c0, %c0_0] : memref<8x128xf32, #tpu.memory_space<vmem>>, vector<8x128xf32>
    %1 = vector.extract_strided_slice %0 {offsets = [0, 0], sizes = [1, 32], strides = [1, 1]} : vector<8x128xf32> to vector<1x32xf32>
    %2 = vector.extract_strided_slice %0 {offsets = [1, 0], sizes = [1, 32], strides = [1, 1]} : vector<8x128xf32> to vector<1x32xf32>
    %3 = vector.extract_strided_slice %0 {offsets = [2, 0], sizes = [1, 32], strides = [1, 1]} : vector<8x128xf32> to vector<1x32xf32>
    %4 = vector.extract_strided_slice %0 {offsets = [3, 0], sizes = [1, 128], strides = [1, 1]} : vector<8x128xf32> to vector<1x128xf32>
    %5 = vector.extract_strided_slice %0 {offsets = [4, 0], sizes = [1, 128], strides = [1, 1]} : vector<8x128xf32> to vector<1x128xf32>
    %6 = vector.extract_strided_slice %0 {offsets = [5, 0], sizes = [1, 128], strides = [1, 1]} : vector<8x128xf32> to vector<1x128xf32>
    %7 = tpu.iota {dimensions = array<i32: 0>} : vector<16x1xi32>
    %c8_i32 = arith.constant 8 : i32
    %8 = vector.broadcast %c8_i32 : i32 to vector<16x1xi32>
    %9 = arith.cmpi slt, %7, %8 : vector<16x1xi32>
    %c0_1 = arith.constant 0 : index
    %c0_2 = arith.constant 0 : index
    %10 = vector.load %arg0[%c0_1, %c0_2] : memref<16x128xf32, #tpu.memory_space<vmem>>, vector<16x128xf32>
    %c0_3 = arith.constant 0 : index
    %c0_4 = arith.constant 0 : index
    %11 = vector.load %arg1[%c0_3, %c0_4] : memref<128x32xf32, #tpu.memory_space<vmem>>, vector<128x32xf32>
    %cst = arith.constant dense<0.000000e+00> : vector<16x32xf32>
    %12 = tpu.matmul %10, %11, %cst {dimension_numbers = #tpu.dot_dimension_numbers<[1], [0], [0], [1], [0, 0, 1, 1], [], []>} : vector<16x128xf32>, vector<128x32xf32>, vector<16x32xf32> -> vector<16x32xf32>
    %13 = vector.broadcast %1 : vector<1x32xf32> to vector<16x32xf32>
    %14 = arith.addf %12, %13 : vector<16x32xf32>
    %15 = vector.extract_strided_slice %14 {offsets = [0, 0], sizes = [8, 32], strides = [1, 1]} : vector<16x32xf32> to vector<8x32xf32>
    %16 = vector.extract_strided_slice %14 {offsets = [8, 0], sizes = [8, 32], strides = [1, 1]} : vector<16x32xf32> to vector<8x32xf32>
    %cst_5 = arith.constant dense<0.000000e+00> : vector<32xf32>
    %17 = vector.multi_reduction <add>, %15, %cst_5 [0] : vector<8x32xf32> to vector<32xf32>
    %18 = vector.shape_cast %17 : vector<32xf32> to vector<1x32xf32>
    %cst_6 = arith.constant 8.000000e+00 : f32
    %19 = vector.broadcast %cst_6 : f32 to vector<1x32xf32>
    %20 = arith.divf %18, %19 : vector<1x32xf32>
    %cst_7 = arith.constant dense<0.000000e+00> : vector<32xf32>
    %21 = vector.multi_reduction <add>, %16, %cst_7 [0] : vector<8x32xf32> to vector<32xf32>
    %22 = vector.shape_cast %21 : vector<32xf32> to vector<1x32xf32>
    %cst_8 = arith.constant 8.000000e+00 : f32
    %23 = vector.broadcast %cst_8 : f32 to vector<1x32xf32>
    %24 = arith.divf %22, %23 : vector<1x32xf32>
    %25 = vector.broadcast %20 : vector<1x32xf32> to vector<8x32xf32>
    %26 = arith.subf %15, %25 : vector<8x32xf32>
    %27 = vector.broadcast %20 : vector<1x32xf32> to vector<8x32xf32>
    %28 = arith.subf %15, %27 : vector<8x32xf32>
    %29 = arith.mulf %26, %28 : vector<8x32xf32>
    %cst_9 = arith.constant dense<0.000000e+00> : vector<32xf32>
    %30 = vector.multi_reduction <add>, %29, %cst_9 [0] : vector<8x32xf32> to vector<32xf32>
    %31 = vector.shape_cast %30 : vector<32xf32> to vector<1x32xf32>
    %cst_10 = arith.constant 8.000000e+00 : f32
    %32 = vector.broadcast %cst_10 : f32 to vector<1x32xf32>
    %33 = arith.divf %31, %32 : vector<1x32xf32>
    %34 = vector.broadcast %24 : vector<1x32xf32> to vector<8x32xf32>
    %35 = arith.subf %16, %34 : vector<8x32xf32>
    %36 = vector.broadcast %24 : vector<1x32xf32> to vector<8x32xf32>
    %37 = arith.subf %16, %36 : vector<8x32xf32>
    %38 = arith.mulf %35, %37 : vector<8x32xf32>
    %cst_11 = arith.constant dense<0.000000e+00> : vector<32xf32>
    %39 = vector.multi_reduction <add>, %38, %cst_11 [0] : vector<8x32xf32> to vector<32xf32>
    %40 = vector.shape_cast %39 : vector<32xf32> to vector<1x32xf32>
    %cst_12 = arith.constant 8.000000e+00 : f32
    %41 = vector.broadcast %cst_12 : f32 to vector<1x32xf32>
    %42 = arith.divf %40, %41 : vector<1x32xf32>
    %cst_13 = arith.constant 9.99999974E-6 : f32
    %43 = vector.broadcast %cst_13 : f32 to vector<1x32xf32>
    %44 = arith.addf %33, %43 : vector<1x32xf32>
    %45 = math.rsqrt %44 : vector<1x32xf32>
    %46 = arith.mulf %45, %2 : vector<1x32xf32>
    %cst_14 = arith.constant 9.99999974E-6 : f32
    %47 = vector.broadcast %cst_14 : f32 to vector<1x32xf32>
    %48 = arith.addf %42, %47 : vector<1x32xf32>
    %49 = math.rsqrt %48 : vector<1x32xf32>
    %50 = arith.mulf %49, %2 : vector<1x32xf32>
    %51 = vector.shape_cast %9 : vector<16x1xi1> to vector<16x1xi1>
    %52 = vector.broadcast %51 : vector<16x1xi1> to vector<16x32xi1>
    %53 = vector.shape_cast %46 : vector<1x32xf32> to vector<1x32xf32>
    %54 = vector.broadcast %53 : vector<1x32xf32> to vector<16x32xf32>
    %55 = vector.shape_cast %50 : vector<1x32xf32> to vector<1x32xf32>
    %56 = vector.broadcast %55 : vector<1x32xf32> to vector<16x32xf32>
    %57 = arith.select %52, %54, %56 : vector<16x32xi1>, vector<16x32xf32>
    %58 = arith.mulf %20, %46 : vector<1x32xf32>
    %59 = arith.subf %3, %58 : vector<1x32xf32>
    %60 = arith.mulf %24, %50 : vector<1x32xf32>
    %61 = arith.subf %3, %60 : vector<1x32xf32>
    %62 = vector.shape_cast %9 : vector<16x1xi1> to vector<16x1xi1>
    %63 = vector.broadcast %62 : vector<16x1xi1> to vector<16x32xi1>
    %64 = vector.shape_cast %59 : vector<1x32xf32> to vector<1x32xf32>
    %65 = vector.broadcast %64 : vector<1x32xf32> to vector<16x32xf32>
    %66 = vector.shape_cast %61 : vector<1x32xf32> to vector<1x32xf32>
    %67 = vector.broadcast %66 : vector<1x32xf32> to vector<16x32xf32>
    %68 = arith.select %63, %65, %67 : vector<16x32xi1>, vector<16x32xf32>
    %69 = arith.mulf %14, %57 : vector<16x32xf32>
    %70 = arith.addf %69, %68 : vector<16x32xf32>
    %cst_15 = arith.constant 0.000000e+00 : f32
    %71 = vector.broadcast %cst_15 : f32 to vector<16x32xf32>
    %72 = arith.maximumf %70, %71 : vector<16x32xf32>
    %c0_16 = arith.constant 0 : index
    %c0_17 = arith.constant 0 : index
    %73 = vector.load %arg2[%c0_16, %c0_17] : memref<32x128xf32, #tpu.memory_space<vmem>>, vector<32x128xf32>
    %cst_18 = arith.constant dense<0.000000e+00> : vector<16x128xf32>
    %74 = tpu.matmul %72, %73, %cst_18 {dimension_numbers = #tpu.dot_dimension_numbers<[1], [0], [0], [1], [0, 0, 1, 1], [], []>} : vector<16x32xf32>, vector<32x128xf32>, vector<16x128xf32> -> vector<16x128xf32>
    %75 = vector.broadcast %4 : vector<1x128xf32> to vector<16x128xf32>
    %76 = arith.addf %74, %75 : vector<16x128xf32>
    %77 = vector.extract_strided_slice %76 {offsets = [0, 0], sizes = [8, 128], strides = [1, 1]} : vector<16x128xf32> to vector<8x128xf32>
    %78 = vector.extract_strided_slice %76 {offsets = [8, 0], sizes = [8, 128], strides = [1, 1]} : vector<16x128xf32> to vector<8x128xf32>
    %cst_19 = arith.constant dense<0.000000e+00> : vector<128xf32>
    %79 = vector.multi_reduction <add>, %77, %cst_19 [0] : vector<8x128xf32> to vector<128xf32>
    %80 = vector.shape_cast %79 : vector<128xf32> to vector<1x128xf32>
    %cst_20 = arith.constant 8.000000e+00 : f32
    %81 = vector.broadcast %cst_20 : f32 to vector<1x128xf32>
    %82 = arith.divf %80, %81 : vector<1x128xf32>
    %cst_21 = arith.constant dense<0.000000e+00> : vector<128xf32>
    %83 = vector.multi_reduction <add>, %78, %cst_21 [0] : vector<8x128xf32> to vector<128xf32>
    %84 = vector.shape_cast %83 : vector<128xf32> to vector<1x128xf32>
    %cst_22 = arith.constant 8.000000e+00 : f32
    %85 = vector.broadcast %cst_22 : f32 to vector<1x128xf32>
    %86 = arith.divf %84, %85 : vector<1x128xf32>
    %87 = vector.broadcast %82 : vector<1x128xf32> to vector<8x128xf32>
    %88 = arith.subf %77, %87 : vector<8x128xf32>
    %89 = vector.broadcast %82 : vector<1x128xf32> to vector<8x128xf32>
    %90 = arith.subf %77, %89 : vector<8x128xf32>
    %91 = arith.mulf %88, %90 : vector<8x128xf32>
    %cst_23 = arith.constant dense<0.000000e+00> : vector<128xf32>
    %92 = vector.multi_reduction <add>, %91, %cst_23 [0] : vector<8x128xf32> to vector<128xf32>
    %93 = vector.shape_cast %92 : vector<128xf32> to vector<1x128xf32>
    %cst_24 = arith.constant 8.000000e+00 : f32
    %94 = vector.broadcast %cst_24 : f32 to vector<1x128xf32>
    %95 = arith.divf %93, %94 : vector<1x128xf32>
    %96 = vector.broadcast %86 : vector<1x128xf32> to vector<8x128xf32>
    %97 = arith.subf %78, %96 : vector<8x128xf32>
    %98 = vector.broadcast %86 : vector<1x128xf32> to vector<8x128xf32>
    %99 = arith.subf %78, %98 : vector<8x128xf32>
    %100 = arith.mulf %97, %99 : vector<8x128xf32>
    %cst_25 = arith.constant dense<0.000000e+00> : vector<128xf32>
    %101 = vector.multi_reduction <add>, %100, %cst_25 [0] : vector<8x128xf32> to vector<128xf32>
    %102 = vector.shape_cast %101 : vector<128xf32> to vector<1x128xf32>
    %cst_26 = arith.constant 8.000000e+00 : f32
    %103 = vector.broadcast %cst_26 : f32 to vector<1x128xf32>
    %104 = arith.divf %102, %103 : vector<1x128xf32>
    %cst_27 = arith.constant 9.99999974E-6 : f32
    %105 = vector.broadcast %cst_27 : f32 to vector<1x128xf32>
    %106 = arith.addf %95, %105 : vector<1x128xf32>
    %107 = math.rsqrt %106 : vector<1x128xf32>
    %108 = arith.mulf %107, %5 : vector<1x128xf32>
    %cst_28 = arith.constant 9.99999974E-6 : f32
    %109 = vector.broadcast %cst_28 : f32 to vector<1x128xf32>
    %110 = arith.addf %104, %109 : vector<1x128xf32>
    %111 = math.rsqrt %110 : vector<1x128xf32>
    %112 = arith.mulf %111, %5 : vector<1x128xf32>
    %113 = vector.shape_cast %9 : vector<16x1xi1> to vector<16x1xi1>
    %114 = vector.broadcast %113 : vector<16x1xi1> to vector<16x128xi1>
    %115 = vector.shape_cast %108 : vector<1x128xf32> to vector<1x128xf32>
    %116 = vector.broadcast %115 : vector<1x128xf32> to vector<16x128xf32>
    %117 = vector.shape_cast %112 : vector<1x128xf32> to vector<1x128xf32>
    %118 = vector.broadcast %117 : vector<1x128xf32> to vector<16x128xf32>
    %119 = arith.select %114, %116, %118 : vector<16x128xi1>, vector<16x128xf32>
    %120 = arith.mulf %82, %108 : vector<1x128xf32>
    %121 = arith.subf %6, %120 : vector<1x128xf32>
    %122 = arith.mulf %86, %112 : vector<1x128xf32>
    %123 = arith.subf %6, %122 : vector<1x128xf32>
    %124 = vector.shape_cast %9 : vector<16x1xi1> to vector<16x1xi1>
    %125 = vector.broadcast %124 : vector<16x1xi1> to vector<16x128xi1>
    %126 = vector.shape_cast %121 : vector<1x128xf32> to vector<1x128xf32>
    %127 = vector.broadcast %126 : vector<1x128xf32> to vector<16x128xf32>
    %128 = vector.shape_cast %123 : vector<1x128xf32> to vector<1x128xf32>
    %129 = vector.broadcast %128 : vector<1x128xf32> to vector<16x128xf32>
    %130 = arith.select %125, %127, %129 : vector<16x128xi1>, vector<16x128xf32>
    %131 = arith.mulf %76, %119 : vector<16x128xf32>
    %132 = arith.addf %131, %130 : vector<16x128xf32>
    %cst_29 = arith.constant 0.000000e+00 : f32
    %133 = vector.broadcast %cst_29 : f32 to vector<16x128xf32>
    %134 = arith.maximumf %132, %133 : vector<16x128xf32>
    %135 = tpu.iota {dimensions = array<i32: 1>} : vector<1x128xi32>
    %c8_i32_30 = arith.constant 8 : i32
    %136 = vector.broadcast %c8_i32_30 : i32 to vector<1x128xi32>
    %137 = arith.cmpi slt, %135, %136 : vector<1x128xi32>
    %cst_31 = arith.constant 0xFF800000 : f32
    %138 = vector.shape_cast %137 : vector<1x128xi1> to vector<1x128xi1>
    %139 = vector.broadcast %138 : vector<1x128xi1> to vector<16x128xi1>
    %140 = vector.broadcast %cst_31 : f32 to vector<16x128xf32>
    %141 = arith.select %139, %134, %140 : vector<16x128xi1>, vector<16x128xf32>
    %cst_32 = arith.constant dense<0xFF800000> : vector<16xf32>
    %142 = vector.multi_reduction <maximumf>, %141, %cst_32 [1] : vector<16x128xf32> to vector<16xf32>
    %143 = vector.shape_cast %142 : vector<16xf32> to vector<16x1xf32>
    %144 = vector.broadcast %143 : vector<16x1xf32> to vector<16x128xf32>
    %145 = arith.subf %134, %144 : vector<16x128xf32>
    %146 = math.exp %145 : vector<16x128xf32>
    %cst_33 = arith.constant 0.000000e+00 : f32
    %147 = vector.shape_cast %137 : vector<1x128xi1> to vector<1x128xi1>
    %148 = vector.broadcast %147 : vector<1x128xi1> to vector<16x128xi1>
    %149 = vector.broadcast %cst_33 : f32 to vector<16x128xf32>
    %150 = arith.select %148, %146, %149 : vector<16x128xi1>, vector<16x128xf32>
    %cst_34 = arith.constant dense<0.000000e+00> : vector<16xf32>
    %151 = vector.multi_reduction <add>, %150, %cst_34 [1] : vector<16x128xf32> to vector<16xf32>
    %152 = vector.shape_cast %151 : vector<16xf32> to vector<16x1xf32>
    %153 = vector.broadcast %152 : vector<16x1xf32> to vector<16x128xf32>
    %154 = arith.divf %150, %153 : vector<16x128xf32>
    %155 = vector.extract_strided_slice %154 {offsets = [0, 0], sizes = [8, 128], strides = [1, 1]} : vector<16x128xf32> to vector<8x128xf32>
    %c0_35 = arith.constant 0 : index
    %c0_36 = arith.constant 0 : index
    %156 = vector.load %arg4[%c0_35, %c0_36] : memref<8x128xf32, #tpu.memory_space<vmem>>, vector<8x128xf32>
    tpu.vector_store %arg4[%c0_35, %c0_36], %155 {strides = array<i32>} : memref<8x128xf32, #tpu.memory_space<vmem>>, vector<8x128xf32>,
    %157 = vector.extract_strided_slice %154 {offsets = [8, 0], sizes = [8, 128], strides = [1, 1]} : vector<16x128xf32> to vector<8x128xf32>
    %c0_37 = arith.constant 0 : index
    %c0_38 = arith.constant 0 : index
    %158 = vector.load %arg5[%c0_37, %c0_38] : memref<8x128xf32, #tpu.memory_space<vmem>>, vector<8x128xf32>
    tpu.vector_store %arg5[%c0_37, %c0_38], %157 {strides = array<i32>} : memref<8x128xf32, #tpu.memory_space<vmem>>, vector<8x128xf32>,
    return
  }
}

</mosaic_0001>

<llo_original>
// kernel: classifier_forward.1
$region0: #{classifier_forward.1}
  #allocation0 [shape = 'u32[]', space=smem, size = 0x4, offset = 0x4, fixed_abs, tag = 'smem constant byte address 0x4 - core index']
  #allocation1 [shape = 'u32[72,128]{1,0:T(1,128)}', space=vmem, size = 0x9000, scoped, tag = 'internal scratch']
  %s0 = inlined_call_operand.vmem [shape: f32[16,128], index: 0, kind: input, shape index: {}]
  %s1 = inlined_call_operand.vmem [shape: f32[128,32], index: 1, kind: input, shape index: {}]
  %s2 = inlined_call_operand.vmem [shape: f32[32,128], index: 2, kind: input, shape index: {}]
  %s3 = inlined_call_operand.vmem [shape: f32[8,128], index: 3, kind: input, shape index: {}]
  %s4 = inlined_call_operand.hbm [shape: f32[8,128], index: 4, kind: output, shape index: {0}]
  %s5 = inlined_call_operand.hbm [shape: f32[8,128], index: 5, kind: output, shape index: {1}]
  %6 = xla_tuple %s4, %s5
  %s7 = sld [smem:[#allocation0]]
  $region34: #{classifier_forward.1} parent=0
    _
  %s9 = ssub.s32 1, %s7
  %s10 = scalar_select 0, %s9, %s7
  $region1: #{classifier_forward.1} parent=0
    #allocation2 [shape = 'u8[4096]{0}', space=vmem, size = 0x1000, scoped, tag = 'output window, operand 0, single buffered']
    #allocation3 [shape = 's32[1]{0}', space=sflag, size = 0x4, scoped, tag = 'scoped memory for classifier_forward.1']
    #allocation4 [shape = 'u8[4096]{0}', space=vmem, size = 0x1000, scoped, tag = 'output window, operand 1, single buffered']
    #allocation5 [shape = 's32[1]{0}', space=sflag, size = 0x4, scoped, tag = 'scoped memory for classifier_forward.1']
    %11 = vsyncpa [#allocation3], 0
    %12 = vsyncpa [#allocation5], 0
    // Predicated region
    $region2: #{classifier_forward.1} parent=1 // pred_check
      _
    $region3: #{classifier_forward.1} parent=1 // pred_check_branch
      %14 = sbr.rel (0) target = $region5
    $region4: #{classifier_forward.1} parent=1 // pred_region
      _
    $region5: #{classifier_forward.1} parent=1 // pred_fallthru
      _
    // Predicated region
    $region6: #{classifier_forward.1} parent=1 // pred_check
      _
    $region7: #{classifier_forward.1} parent=1 // pred_check_branch
      %16 = sbr.rel (0) target = $region9
    $region8: #{classifier_forward.1} parent=1 // pred_region
      _
    $region9: #{classifier_forward.1} parent=1 // pred_fallthru
      _
    // Predicated region
    $region10: #{classifier_forward.1} parent=1 // pred_check
      _
    $region11: #{classifier_forward.1} parent=1 // pred_check_branch
      %18 = sbr.rel (0) target = $region13
    $region12: #{classifier_forward.1} parent=1 // pred_region
      _
    $region13: #{classifier_forward.1} parent=1 // pred_fallthru
      _
    // Predicated region
    $region14: #{classifier_forward.1} parent=1 // pred_check
      _
    $region15: #{classifier_forward.1} parent=1 // pred_check_branch
      %20 = sbr.rel (0) target = $region17
    $region16: #{classifier_forward.1} parent=1 // pred_region
      _
    $region17: #{classifier_forward.1} parent=1 // pred_fallthru
      _
    %v21 = vld [vmem:[%s3] sm:$0xff]
    %v22 = vlaneseq
    %v23 = vshrl.u32 %v22, 7
    %v24 = vadd.s32 %v23, 8
    %vm25 = vcmp.lt.s32.totalorder %v23, 8
    %vm26 = vcmp.lt.s32.totalorder %v24, 8
    %v27 = vld [vmem:[%s0] sm:$0xff]
    %v28 = vld [vmem:[%s0 + $0x8] sm:$0xff]
    %v29 = vld [vmem:[%s1] sm:$0xff]
    %v30 = vld [vmem:[%s1 + $0x8] sm:$0xff]
    %v31 = vld [vmem:[%s1 + $0x10] sm:$0xff]
    %v32 = vld [vmem:[%s1 + $0x18] sm:$0xff]
    %v33 = vld [vmem:[%s1 + $0x20] sm:$0xff]
    %v34 = vld [vmem:[%s1 + $0x28] sm:$0xff]
    %v35 = vld [vmem:[%s1 + $0x30] sm:$0xff]
    %v36 = vld [vmem:[%s1 + $0x38] sm:$0xff]
    %v37 = vld [vmem:[%s1 + $0x40] sm:$0xff]
    %v38 = vld [vmem:[%s1 + $0x48] sm:$0xff]
    %v39 = vld [vmem:[%s1 + $0x50] sm:$0xff]
    %v40 = vld [vmem:[%s1 + $0x58] sm:$0xff]
    %v41 = vld [vmem:[%s1 + $0x60] sm:$0xff]
    %v42 = vld [vmem:[%s1 + $0x68] sm:$0xff]
    %v43 = vld [vmem:[%s1 + $0x70] sm:$0xff]
    %v44 = vld [vmem:[%s1 + $0x78] sm:$0xff]
    %v45 = vperm.slane %v21, 0
    %46 = vmatpush.msra.mxu0 %v44
    %47 = vmatpush.msra.mxu0 %v43
    %48 = vmatpush.msra.mxu0 %v42
    %49 = vmatpush.msra.mxu0 %v41
    %50 = vmatpush.msra.mxu0 %v40
    %51 = vmatpush.msra.mxu0 %v39
    %52 = vmatpush.msra.mxu0 %v38
    %53 = vmatpush.msra.mxu0 %v37
    %54 = vmatpush.msra.mxu0 %v36
    %55 = vmatpush.msra.mxu0 %v35
    %56 = vmatpush.msra.mxu0 %v34
    %57 = vmatpush.msra.mxu0 %v33
    %58 = vmatpush.msra.mxu0 %v32
    %59 = vmatpush.msra.mxu0 %v31
    %60 = vmatpush.msra.mxu0 %v30
    %61 = vmatpush.msra.mxu0 %v29
    %62 = vmatmul.f32.gmra.mxu0 %v27
    %v63 = vpop.f32.mrf.mxu0
    %v64 = vadd.f32 %v45, %v63
    %65 = vmatmul.f32.gmra.mxu0 %v28
    %v66 = vpop.f32.mrf.mxu0
    %v67 = vadd.f32 %v45, %v66
    %68 = vdwg.mxu0
    %vm69 = vcmask 261120
    %v70 = vsel %vm69, %v64, 0.0
    %v71 = vrot.slane %v70, 4
    %v72 = vadd.f32 %v70, %v71
    %v73 = vrot.slane %v72, 2
    %v74 = vadd.f32 %v72, %v73
    %v75 = vrot.slane %v74, 1
    %v76 = vadd.f32 %v74, %v75
    %v77 = vrcp.pop 8.0
    %v78 = vmul.f32 8.0, %v77
    %v79 = vsub.f32 1.0, %v78
    %v80 = vmul.f32 %v77, %v79
    %v81 = vadd.f32 %v77, %v80
    %vm82 = vweird.f32 %v77
    %v83 = vsel %vm82, %v77, %v81
    %v84 = vmul.f32 %v76, %v83
    %v85 = vsel %vm69, %v67, 0.0
    %v86 = vrot.slane %v85, 4
    %v87 = vadd.f32 %v85, %v86
    %v88 = vrot.slane %v87, 2
    %v89 = vadd.f32 %v87, %v88
    %v90 = vrot.slane %v89, 1
    %v91 = vadd.f32 %v89, %v90
    %v92 = vmul.f32 %v91, %v83
    %v93 = vsub.f32 %v64, %v84
    %v94 = vmul.f32 %v93, %v93
    %v95 = vsel %vm69, %v94, 0.0
    %v96 = vrot.slane %v95, 4
    %v97 = vadd.f32 %v95, %v96
    %v98 = vrot.slane %v97, 2
    %v99 = vadd.f32 %v97, %v98
    %v100 = vrot.slane %v99, 1
    %v101 = vadd.f32 %v99, %v100
    %v102 = vmul.f32 %v101, %v83
    %v103 = vsub.f32 %v67, %v92
    %v104 = vmul.f32 %v103, %v103
    %v105 = vsel %vm69, %v104, 0.0
    %v106 = vrot.slane %v105, 4
    %v107 = vadd.f32 %v105, %v106
    %v108 = vrot.slane %v107, 2
    %v109 = vadd.f32 %v107, %v108
    %v110 = vrot.slane %v109, 1
    %v111 = vadd.f32 %v109, %v110
    %v112 = vmul.f32 %v111, %v83
    %v113 = vadd.f32 %v102, 1e-05
    %v114 = vrsqrt.pop %v113
    %v115 = vmul.f32 %v114, %v113
    %v116 = vmul.f32 %v115, %v114
    %v117 = vmul.f32 0.5, %v116
    %v118 = vsub.f32 1.5, %v117
    %v119 = vmul.f32 %v114, %v118
    %vm120 = vweird.f32 %v113
    %vm121 = vweird.f32 %v114
    %vm122 = vmor %vm120, %vm121
    %v123 = vsel %vm122, %v114, %v119
    %v124 = vmul.f32 %v123, %v21
    %v125 = vadd.f32 %v112, 1e-05
    %v126 = vrsqrt.pop %v125
    %v127 = vmul.f32 %v126, %v125
    %v128 = vmul.f32 %v127, %v126
    %v129 = vmul.f32 0.5, %v128
    %v130 = vsub.f32 1.5, %v129
    %v131 = vmul.f32 %v126, %v130
    %vm132 = vweird.f32 %v125
    %vm133 = vweird.f32 %v126
    %vm134 = vmor %vm132, %vm133
    %v135 = vsel %vm134, %v126, %v131
    %v136 = vmul.f32 %v135, %v21
    %v137 = vsel %vm25, 1, 0
    %v138 = vsel %vm26, 1, 0
    %vm139 = vcmp.eq.s32.totalorder %v137, 1
    %vm140 = vcmp.eq.s32.totalorder %v138, 1
    %v141 = vperm.slane %v124, 1
    %v142 = vperm.slane %v136, 1
    %v143 = vsel %vm139, %v141, %v142
    %v144 = vsel %vm140, %v141, %v142
    %v145 = vmul.f32 %v84, %v124
    %v147 = vrot.slane %v145, 7
    %v149 = vsub.f32 %v21, %v147
    %v150 = vmul.f32 %v92, %v136
    %v152 = vrot.slane %v150, 7
    %v154 = vsub.f32 %v21, %v152
    %v155 = vperm.slane %v149, 2
    %v156 = vperm.slane %v154, 2
    %v157 = vsel %vm139, %v155, %v156
    %v158 = vsel %vm140, %v155, %v156
    %v159 = vmul.f32 %v64, %v143
    %v160 = vmul.f32 %v67, %v144
    %v161 = vadd.f32 %v159, %v157
    %v162 = vadd.f32 %v160, %v158
    %v163 = vmax.f32 %v161, 0.0
    %v164 = vmax.f32 %v162, 0.0
    %v165 = vld [vmem:[%s2] sm:$0xff]
    %v166 = vld [vmem:[%s2 + $0x8] sm:$0xff]
    %v167 = vld [vmem:[%s2 + $0x10] sm:$0xff]
    %v168 = vld [vmem:[%s2 + $0x18] sm:$0xff]
    %v169 = vperm.slane %v21, 3
    %v171 = vsel %vm69, %v163, 0
    %v174 = vsel %vm69, %v164, 0
    %176 = vmatpush.msra.mxu0 0.0
    %177 = vmatpush.msra.mxu0 0.0
    %178 = vmatpush.msra.mxu0 0.0
    %179 = vmatpush.msra.mxu0 0.0
    %180 = vmatpush.msra.mxu0 0.0
    %181 = vmatpush.msra.mxu0 0.0
    %182 = vmatpush.msra.mxu0 0.0
    %183 = vmatpush.msra.mxu0 0.0
    %184 = vmatpush.msra.mxu0 0.0
    %185 = vmatpush.msra.mxu0 0.0
    %186 = vmatpush.msra.mxu0 0.0
    %187 = vmatpush.msra.mxu0 0.0
    %188 = vmatpush.msra.mxu0 %v168
    %189 = vmatpush.msra.mxu0 %v167
    %190 = vmatpush.msra.mxu0 %v166
    %191 = vmatpush.msra.mxu0 %v165
    %192 = vmatmul.f32.gmra.mxu0 %v171
    %v193 = vpop.f32.mrf.mxu0
    %v194 = vadd.f32 %v169, %v193
    %195 = vmatmul.f32.gmra.mxu0 %v174
    %v196 = vpop.f32.mrf.mxu0
    %v197 = vadd.f32 %v169, %v196
    %198 = vdwg.mxu0
    %v199 = vrot.slane %v194, 4
    %v200 = vadd.f32 %v194, %v199
    %v201 = vrot.slane %v200, 2
    %v202 = vadd.f32 %v200, %v201
    %v203 = vrot.slane %v202, 1
    %v204 = vadd.f32 %v202, %v203
    %v205 = vmul.f32 %v204, %v83
    %v206 = vrot.slane %v197, 4
    %v207 = vadd.f32 %v197, %v206
    %v208 = vrot.slane %v207, 2
    %v209 = vadd.f32 %v207, %v208
    %v210 = vrot.slane %v209, 1
    %v211 = vadd.f32 %v209, %v210
    %v212 = vmul.f32 %v211, %v83
    %v213 = vsub.f32 %v194, %v205
    %v214 = vmul.f32 %v213, %v213
    %v215 = vrot.slane %v214, 4
    %v216 = vadd.f32 %v214, %v215
    %v217 = vrot.slane %v216, 2
    %v218 = vadd.f32 %v216, %v217
    %v219 = vrot.slane %v218, 1
    %v220 = vadd.f32 %v218, %v219
    %v221 = vmul.f32 %v220, %v83
    %v222 = vsub.f32 %v197, %v212
    %v223 = vmul.f32 %v222, %v222
    %v224 = vrot.slane %v223, 4
    %v225 = vadd.f32 %v223, %v224
    %v226 = vrot.slane %v225, 2
    %v227 = vadd.f32 %v225, %v226
    %v228 = vrot.slane %v227, 1
    %v229 = vadd.f32 %v227, %v228
    %v230 = vmul.f32 %v229, %v83
    %v231 = vadd.f32 %v221, 1e-05
    %v232 = vrsqrt.pop %v231
    %v233 = vmul.f32 %v232, %v231
    %v234 = vmul.f32 %v233, %v232
    %v235 = vmul.f32 0.5, %v234
    %v236 = vsub.f32 1.5, %v235
    %v237 = vmul.f32 %v232, %v236
    %vm238 = vweird.f32 %v231
    %vm239 = vweird.f32 %v232
    %vm240 = vmor %vm238, %vm239
    %v241 = vsel %vm240, %v232, %v237
    %v242 = vmul.f32 %v241, %v21
    %v243 = vadd.f32 %v230, 1e-05
    %v244 = vrsqrt.pop %v243
    %v245 = vmul.f32 %v244, %v243
    %v246 = vmul.f32 %v245, %v244
    %v247 = vmul.f32 0.5, %v246
    %v248 = vsub.f32 1.5, %v247
    %v249 = vmul.f32 %v244, %v248
    %vm250 = vweird.f32 %v243
    %vm251 = vweird.f32 %v244
    %vm252 = vmor %vm250, %vm251
    %v253 = vsel %vm252, %v244, %v249
    %v254 = vmul.f32 %v253, %v21
    %v255 = vperm.slane %v242, 4
    %v256 = vperm.slane %v254, 4
    %v257 = vsel %vm139, %v255, %v256
    %v258 = vsel %vm140, %v255, %v256
    %v259 = vmul.f32 %v205, %v242
    %v261 = vrot.slane %v259, 7
    %v263 = vsub.f32 %v21, %v261
    %v264 = vmul.f32 %v212, %v254
    %v266 = vrot.slane %v264, 7
    %v268 = vsub.f32 %v21, %v266
    %v269 = vperm.slane %v263, 5
    %v270 = vperm.slane %v268, 5
    %v271 = vsel %vm139, %v269, %v270
    %v272 = vsel %vm140, %v269, %v270
    %v273 = vmul.f32 %v194, %v257
    %v274 = vmul.f32 %v197, %v258
    %v275 = vadd.f32 %v273, %v271
    %v276 = vadd.f32 %v274, %v272
    %v277 = vmax.f32 %v275, 0.0
    %v278 = vmax.f32 %v276, 0.0
    %v279 = vlaneseq
    %v280 = vand.u32 %v279, 127
    %vm281 = vcmp.lt.s32.totalorder %v280, 8
    %v282 = vsel %vm281, 1, 0
    %vm283 = vcmp.eq.s32.totalorder %v282, 1
    %v284 = vsel %vm283, %v277, -inf
    %v285 = vsel %vm283, %v278, -inf
    %286 = vmax.xlane.f32.xlu0 %v284
    %v287 = vpop.xlane.xlu0 %286
    %288 = vmax.xlane.f32.xlu0 %v285
    %v289 = vpop.xlane.xlu0 %288
    %v290 = vsub.f32 %v277, %v287
    %v291 = vsub.f32 %v278, %v289
    %v292 = vmul.f32 %v290, 1.442695
    %v293 = vpow.pop %v292
    %v294 = vmul.f32 %v291, 1.442695
    %v295 = vpow.pop %v294
    %v296 = vsel %vm283, %v293, 0.0
    %v297 = vsel %vm283, %v295, 0.0
    %298 = vadd.xlane.f32.xlu0 %v296
    %v299 = vpop.xlane.xlu0 %298
    %300 = vadd.xlane.f32.xlu0 %v297
    %v301 = vpop.xlane.xlu0 %300
    %v302 = vrcp.pop %v299
    %v303 = vmul.f32 %v299, %v302
    %v304 = vsub.f32 1.0, %v303
    %v305 = vmul.f32 %v302, %v304
    %v306 = vadd.f32 %v302, %v305
    %vm307 = vweird.f32 %v299
    %vm308 = vweird.f32 %v302
    %vm309 = vmor %vm307, %vm308
    %v310 = vsel %vm309, %v302, %v306
    %v311 = vand.u32 2147483647, %v299
    %vm312 = vcmp.eq.f32.partialorder %v311, 8.507059e+37
    %v313 = vand.u32 %v299, 2147483648
    %v314 = vor.u32 1.1754944e-38, %v313
    %v315 = vsel %vm312, %v314, %v310
    %v316 = vmul.f32 %v296, %v315
    %v317 = vrcp.pop %v301
    %v318 = vmul.f32 %v301, %v317
    %v319 = vsub.f32 1.0, %v318
    %v320 = vmul.f32 %v317, %v319
    %v321 = vadd.f32 %v317, %v320
    %vm322 = vweird.f32 %v301
    %vm323 = vweird.f32 %v317
    %vm324 = vmor %vm322, %vm323
    %v325 = vsel %vm324, %v317, %v321
    %v326 = vand.u32 2147483647, %v301
    %vm327 = vcmp.eq.f32.partialorder %v326, 8.507059e+37
    %v328 = vand.u32 %v301, 2147483648
    %v329 = vor.u32 1.1754944e-38, %v328
    %v330 = vsel %vm327, %v329, %v325
    %v331 = vmul.f32 %v297, %v330
    %332 = vst [vmem:[#allocation2] sm:$0xff] %v316
    %333 = vst [vmem:[#allocation4] sm:$0xff] %v331
    // Predicated region
    $region18: #{classifier_forward.1} parent=1 // pred_check
      _
    $region19: #{classifier_forward.1} parent=1 // pred_check_branch
      %335 = sbr.rel (0) target = $region21
    $region20: #{classifier_forward.1} parent=1 // pred_region
      %337 = vsyncadd [#allocation3], 0
      %s339 = sshll.u32 [#allocation2], 4
      %s340 = int_to_ptr.vmem [resolvable:$true] %s339
      %s341 = sshll.u32 %s4, 4
      %s342 = int_to_ptr.hbm [resolvable:$true] %s341
      %344 = dma.vmem_to_hbm [thread:$0]  %s340, 128, %s342, [#allocation3]
    $region21: #{classifier_forward.1} parent=1 // pred_fallthru
      _
    // Predicated region
    $region22: #{classifier_forward.1} parent=1 // pred_check
      _
    $region23: #{classifier_forward.1} parent=1 // pred_check_branch
      %346 = sbr.rel (0) target = $region25
    $region24: #{classifier_forward.1} parent=1 // pred_region
      %348 = vsyncadd [#allocation5], 0
      %s350 = sshll.u32 [#allocation4], 4
      %s351 = int_to_ptr.vmem [resolvable:$true] %s350
      %s352 = sshll.u32 %s5, 4
      %s353 = int_to_ptr.hbm [resolvable:$true] %s352
      %355 = dma.vmem_to_hbm [thread:$0]  %s351, 128, %s353, [#allocation5]
    $region25: #{classifier_forward.1} parent=1 // pred_fallthru
      _
    // Predicated region
    $region26: #{classifier_forward.1} parent=1 // pred_check
      _
    $region27: #{classifier_forward.1} parent=1 // pred_check_branch
      %357 = sbr.rel (0) target = $region29
    $region28: #{classifier_forward.1} parent=1 // pred_region
      %359 = dma.done [#allocation3], 128
    $region29: #{classifier_forward.1} parent=1 // pred_fallthru
      _
    // Predicated region
    $region30: #{classifier_forward.1} parent=1 // pred_check
      _
    $region31: #{classifier_forward.1} parent=1 // pred_check_branch
      %361 = sbr.rel (0) target = $region33
    $region32: #{classifier_forward.1} parent=1 // pred_region
      %363 = dma.done [#allocation5], 128
    $region33: #{classifier_forward.1} parent=1 // pred_fallthru
      _
    %364 = vsyncpa [#allocation3], 1
    %365 = vsyncpa [#allocation5], 1

</llo_original>
